<compile_context>
chip_gen: v5e
topology: v5e:2x2
jax: 0.10.0
libtpu: 0.0.40
codegen_flags: <defaults>
</compile_context>

<pallas_src>
import functools
import math

import jax
import jax.numpy as jnp
from jax import lax
from jax.experimental import pallas as pl
from jax.experimental.pallas import tpu as pltpu


DEFAULT_MASK_VALUE = -0.7 * float(jnp.finfo(jnp.float32).max)


# ---------------------------------------------------------------------------
# helpers
# ---------------------------------------------------------------------------

def _nbytes(shape, dtype) -> int:
    return int(math.prod(shape)) * jnp.dtype(dtype).itemsize


def _vmem_limit_bytes(tile_bytes: int) -> int:
    """Scoped-VMEM budget: actual tile bytes + headroom for compiler-internal
    scratch, clamped to ~90% of physical capacity (64 MiB v7x, 128 MiB v5e/v6e)."""
    cap = 128 * 1024 * 1024
    try:
        info = pltpu.get_tpu_info()
        cap = int(getattr(info, "vmem_capacity_bytes", cap))
    except Exception:
        pass
    headroom = 16 * 1024 * 1024
    return int(max(32 * 1024 * 1024, min(tile_bytes + headroom, int(cap * 0.9))))


def _pick_tile(dim: int, pref: int, base: int, allow_partial: bool) -> int:
    """Largest tile <= pref that is a multiple of `base` and divides `dim`.
    If none exists: cap at pref when the caller masks/clips overhang blocks,
    otherwise fall back to the full dimension (always exact)."""
    if dim <= pref:
        return dim
    t = (pref // base) * base
    while t >= base:
        if dim % t == 0:
            return t
        t -= base
    return min(dim, pref) if allow_partial else dim


# ---------------------------------------------------------------------------
# tiled matmul kernels (wq / wk / wv / wo projections)
# ---------------------------------------------------------------------------

def _matmul_kernel_f32out(a_ref, b_ref, o_ref):
    # f32 output block is resident across the k axis -> accumulate in place.
    @pl.when(pl.program_id(2) == 0)
    def _():
        o_ref[...] = jnp.zeros_like(o_ref)

    o_ref[...] += jnp.dot(a_ref[...], b_ref[...],
                          preferred_element_type=jnp.float32)


def _matmul_kernel_scratch(a_ref, b_ref, o_ref, acc_ref):
    @pl.when(pl.program_id(2) == 0)
    def _():
        acc_ref[...] = jnp.zeros_like(acc_ref)

    acc_ref[...] += jnp.dot(a_ref[...], b_ref[...],
                            preferred_element_type=jnp.float32)

    @pl.when(pl.program_id(2) == pl.num_programs(2) - 1)
    def _():
        o_ref[...] = acc_ref[...].astype(o_ref.dtype)


def matmul(a, b, *, out_dtype=None, tm_pref=256, tn_pref=1024, tk_pref=512):
    M, K = a.shape
    K2, N = b.shape
    assert K == K2, (a.shape, b.shape)
    out_dtype = out_dtype or a.dtype

    sub = 16 if a.dtype == jnp.bfloat16 else 8
    # Projection dims (d_model, H*D) always have nice divisors, so the exact
    # (non-partial) fallback to the full dim essentially never triggers.
    tm = _pick_tile(M, tm_pref, sub, allow_partial=False)
    tn = _pick_tile(N, tn_pref, 128, allow_partial=False)
    tk = _pick_tile(K, tk_pref, 128, allow_partial=False)
    grid = (M // tm, N // tn, K // tk)

    f32_out = jnp.dtype(out_dtype) == jnp.dtype(jnp.float32)
    kernel = _matmul_kernel_f32out if f32_out else _matmul_kernel_scratch
    scratch = [] if f32_out else [pltpu.VMEM((tm, tn), jnp.float32)]

    tile_bytes = (2 * _nbytes((tm, tk), a.dtype)
                  + 2 * _nbytes((tk, tn), b.dtype)
                  + 2 * _nbytes((tm, tn), out_dtype)
                  + (0 if f32_out else _nbytes((tm, tn), jnp.float32)))

    return pl.pallas_call(
        kernel,
        out_shape=jax.ShapeDtypeStruct((M, N), out_dtype),
        grid=grid,
        in_specs=[
            pl.BlockSpec((tm, tk), lambda i, j, k: (i, k)),
            pl.BlockSpec((tk, tn), lambda i, j, k: (k, j)),
        ],
        out_specs=pl.BlockSpec((tm, tn), lambda i, j, k: (i, j)),
        scratch_shapes=scratch,
        compiler_params=pltpu.CompilerParams(
            dimension_semantics=("parallel", "parallel", "arbitrary"),
            vmem_limit_bytes=_vmem_limit_bytes(tile_bytes)),
    )(a, b)


# ---------------------------------------------------------------------------
# in-place (aliased) KV-cache update kernel
# ---------------------------------------------------------------------------

def _kv_update_kernel(new_ref, cache_ref, out_ref):
    del cache_ref  # aliased with out_ref; untouched blocks keep old contents
    out_ref[...] = new_ref[...]


def update_kv_cache(cache, new, start_pos: int):
    """Scatter `new` (bsz, seqlen, KVH, D) into cache[:bsz, start_pos:start_pos+seqlen]
    using input/output aliasing so only the written rows move."""
    bsz, seqlen, kvh, d = new.shape
    return pl.pallas_call(
        _kv_update_kernel,
        out_shape=jax.ShapeDtypeStruct(cache.shape, cache.dtype),
        grid=(bsz, seqlen),
        in_specs=[
            pl.BlockSpec((1, 1, kvh, d), lambda b, s: (b, s, 0, 0)),
            pl.BlockSpec((1, 1, kvh, d), lambda b, s: (b, start_pos + s, 0, 0)),
        ],
        out_specs=pl.BlockSpec((1, 1, kvh, d), lambda b, s: (b, start_pos + s, 0, 0)),
        input_output_aliases={1: 0},
    )(new.astype(cache.dtype), cache)


# ---------------------------------------------------------------------------
# GQA flash-attention kernel (online softmax, in-kernel causal mask,
# kv grouping + all heads handled per block)
# ---------------------------------------------------------------------------

def _gqa_attn_kernel(q_ref, k_ref, v_ref, o_ref, m_sc, l_sc, acc_sc, *,
                     scale, start_pos, kv_len, causal, need_len_mask):
    qi = pl.program_id(1)
    ki = pl.program_id(2)
    _, tq, n_heads, d = q_ref.shape
    _, tkv, n_kv_heads, _ = k_ref.shape
    n_rep = n_heads // n_kv_heads

    @pl.when(ki == 0)
    def _init():
        m_sc[...] = jnp.full_like(m_sc, -jnp.inf)
        l_sc[...] = jnp.zeros_like(l_sc)
        acc_sc[...] = jnp.zeros_like(acc_sc)

    def _compute():
        # Fold softmax scale into q once (D-wide) instead of scaling every
        # (tq, tkv) score tile; keeps the caller's dtype for the MXU.
        q = q_ref[0] * scale                       # (tq, H, D)
        k = k_ref[0]                               # (tkv, KVH, D)
        v = v_ref[0]

        mask = None
        if causal or need_len_mask:
            r_idx = lax.broadcasted_iota(jnp.int32, (tq, tkv), 0)
            c_idx = lax.broadcasted_iota(jnp.int32, (tq, tkv), 1)
            kv_pos = ki * tkv + c_idx
            if causal:
                q_pos = start_pos + qi * tq + r_idx
                mask = kv_pos <= q_pos
            if need_len_mask:
                len_ok = kv_pos < kv_len
                mask = len_ok if mask is None else (mask & len_ok)

        for g in range(n_kv_heads):                # GQA: q head h -> kv head h // n_rep
            kg = k[:, g, :]                        # (tkv, D)
            vg = v[:, g, :]
            for r in range(n_rep):
                h = g * n_rep + r
                s = lax.dot_general(q[:, h, :], kg, (((1,), (1,)), ((), ())),
                                    preferred_element_type=jnp.float32)
                if mask is not None:
                    s = jnp.where(mask, s, DEFAULT_MASK_VALUE)
                m_prev = m_sc[h]
                m_new = jnp.maximum(m_prev, s.max(axis=-1, keepdims=True))
                alpha = jnp.exp(m_prev - m_new)
                p = jnp.exp(s - m_new)
                l_sc[h] = alpha * l_sc[h] + p.sum(axis=-1, keepdims=True)
                acc_sc[h] = alpha * acc_sc[h] + lax.dot_general(
                    p.astype(vg.dtype), vg, (((1,), (0,)), ((), ())),
                    preferred_element_type=jnp.float32)
                m_sc[h] = m_new

    if causal:
        # Skip kv tiles lying entirely above the causal diagonal for this q tile.
        pl.when(ki * tkv <= start_pos + (qi + 1) * tq - 1)(_compute)
    else:
        _compute()

    @pl.when(ki == pl.num_programs(2) - 1)
    def _finalize():
        for h in range(n_heads):
            inv_l = pl.reciprocal(l_sc[h], approx=True)   # EUP, off the VPU slot
            o_ref[0, :, h, :] = (acc_sc[h] * inv_l).astype(o_ref.dtype)


def gqa_attention(q, k_cache, v_cache, *, kv_len, start_pos, causal, scale,
                  tq_pref=256, tkv_pref=512):
    """q: (bsz, seqlen, H, D).  k_cache/v_cache: (B_max, S_max, KVH, D), read
    directly (rows [0, kv_len)).  Returns (bsz, seqlen, H, D)."""
    bsz, seqlen, n_heads, d = q.shape
    _, s_max, n_kv_heads, _ = k_cache.shape

    tq = _pick_tile(seqlen, tq_pref, 8, allow_partial=True)
    tkv = _pick_tile(kv_len, tkv_pref, 128, allow_partial=True)
    n_q = pl.cdiv(seqlen, tq)
    n_kv = pl.cdiv(kv_len, tkv)
    need_len_mask = (n_kv * tkv) != kv_len
    grid = (bsz, n_q, n_kv)

    kernel = functools.partial(
        _gqa_attn_kernel, scale=scale, start_pos=start_pos, kv_len=kv_len,
        causal=causal, need_len_mask=need_len_mask)

    tile_bytes = (2 * _nbytes((1, tq, n_heads, d), q.dtype)
                  + 4 * _nbytes((1, tkv, n_kv_heads, d), k_cache.dtype)
                  + 2 * _nbytes((1, tq, n_heads, d), q.dtype)
                  + 2 * _nbytes((n_heads, tq, 128), jnp.float32)       # m, l (lane pad)
                  + _nbytes((n_heads, tq, max(d, 128)), jnp.float32))  # acc

    # TODO(synk): for head_dim < 128, pack heads into lanes on writeback
    # (emit (S, H*D) blocks) to avoid masked partial stores in the epilogue.
    return pl.pallas_call(
        kernel,
        out_shape=jax.ShapeDtypeStruct((bsz, seqlen, n_heads, d), q.dtype),
        grid=grid,
        in_specs=[
            pl.BlockSpec((1, tq, n_heads, d), lambda b, qi, ki: (b, qi, 0, 0)),
            pl.BlockSpec((1, tkv, n_kv_heads, d), lambda b, qi, ki: (b, ki, 0, 0)),
            pl.BlockSpec((1, tkv, n_kv_heads, d), lambda b, qi, ki: (b, ki, 0, 0)),
        ],
        out_specs=pl.BlockSpec((1, tq, n_heads, d), lambda b, qi, ki: (b, qi, 0, 0)),
        scratch_shapes=[
            pltpu.VMEM((n_heads, tq, 1), jnp.float32),
            pltpu.VMEM((n_heads, tq, 1), jnp.float32),
            pltpu.VMEM((n_heads, tq, d), jnp.float32),
        ],
        compiler_params=pltpu.CompilerParams(
            dimension_semantics=("parallel", "parallel", "arbitrary"),
            vmem_limit_bytes=_vmem_limit_bytes(tile_bytes)),
    )(q, k_cache, v_cache)


# ---------------------------------------------------------------------------
# wrapper: full GQA forward (projections + RoPE + cache + attention + wo)
# ---------------------------------------------------------------------------

def _apply_rope(x, cos, sin):
    """LLaMA-style interleaved-pair rotary embedding.
    x: (B, S, H, D); cos/sin: (S, D//2)."""
    dtype = x.dtype
    xf = x.astype(jnp.float32)
    xr = xf.reshape(*xf.shape[:-1], -1, 2)
    x0, x1 = xr[..., 0], xr[..., 1]
    c = cos[None, :, None, :]
    s = sin[None, :, None, :]
    o0 = x0 * c - x1 * s
    o1 = x0 * s + x1 * c
    return jnp.stack([o0, o1], axis=-1).reshape(xf.shape).astype(dtype)


def gqa_forward(x, wq, wk, wv, wo, cache_k, cache_v, start_pos,
                freqs_cos, freqs_sin, *, n_heads, n_kv_heads, causal=True):
    """Functional equivalent of GQA.forward.  Weights are (in, out) layout.
    `causal=True` corresponds to the module's additive causal mask with cache
    offset; `causal=False` corresponds to mask=None (e.g. single-token decode).
    Returns (output, new_cache_k, new_cache_v)."""
    bsz, seqlen, d_model = x.shape
    head_dim = wq.shape[1] // n_heads
    kv_len = start_pos + seqlen

    # projections (Pallas matmul kernels); reshapes below are layout-free views
    x2d = x.reshape(bsz * seqlen, d_model)
    xq = matmul(x2d, wq).reshape(bsz, seqlen, n_heads, head_dim)
    xk = matmul(x2d, wk).reshape(bsz, seqlen, n_kv_heads, head_dim)
    xv = matmul(x2d, wv).reshape(bsz, seqlen, n_kv_heads, head_dim)

    # rotary embedding (elementwise wrapper glue)
    xq = _apply_rope(xq, freqs_cos, freqs_sin)
    xk = _apply_rope(xk, freqs_cos, freqs_sin)

    # KV-cache update (aliased in-place Pallas scatter); cache kept in x.dtype
    if cache_k.dtype != x.dtype:
        cache_k = cache_k.astype(x.dtype)
        cache_v = cache_v.astype(x.dtype)
    cache_k = update_kv_cache(cache_k, xk, start_pos)
    cache_v = update_kv_cache(cache_v, xv, start_pos)

    # attention reads the cache directly in its native layout (no transposes)
    attn = gqa_attention(xq, cache_k, cache_v, kv_len=kv_len,
                         start_pos=start_pos, causal=causal,
                         scale=1.0 / math.sqrt(head_dim))   # (b, s, H, D)

    out = matmul(attn.reshape(bsz * seqlen, n_heads * head_dim), wo)
    return out.reshape(bsz, seqlen, d_model), cache_k, cache_v


# ---------------------------------------------------------------------------
# pure-JAX reference (mirrors the PyTorch forward, with GQA head grouping)
# ---------------------------------------------------------------------------

def gqa_ref(x, wq, wk, wv, wo, cache_k, cache_v, start_pos,
            freqs_cos, freqs_sin, mask, *, n_heads, n_kv_heads):
    HI = lax.Precision.HIGHEST
    bsz, seqlen, d_model = x.shape
    head_dim = wq.shape[1] // n_heads
    n_rep = n_heads // n_kv_heads
    kv_len = start_pos + seqlen

    xq = jnp.einsum("bsd,dk->bsk", x, wq, precision=HI).reshape(
        bsz, seqlen, n_heads, head_dim)
    xk = jnp.einsum("bsd,dk->bsk", x, wk, precision=HI).reshape(
        bsz, seqlen, n_kv_heads, head_dim)
    xv = jnp.einsum("bsd,dk->bsk", x, wv, precision=HI).reshape(
        bsz, seqlen, n_kv_heads, head_dim)

    xq = _apply_rope(xq, freqs_cos, freqs_sin)
    xk = _apply_rope(xk, freqs_cos, freqs_sin)

    cache_k = lax.dynamic_update_slice(cache_k, xk.astype(cache_k.dtype),
                                       (0, start_pos, 0, 0))
    cache_v = lax.dynamic_update_slice(cache_v, xv.astype(cache_v.dtype),
                                       (0, start_pos, 0, 0))
    keys = cache_k[:bsz, :kv_len].astype(x.dtype)
    values = cache_v[:bsz, :kv_len].astype(x.dtype)

    q = jnp.swapaxes(xq, 1, 2)                              # (b, H, S, D)
    k = jnp.repeat(jnp.swapaxes(keys, 1, 2), n_rep, axis=1)
    v = jnp.repeat(jnp.swapaxes(values, 1, 2), n_rep, axis=1)

    scores = jnp.einsum("bhsd,bhkd->bhsk", q, k,
                        precision=HI).astype(jnp.float32) / math.sqrt(head_dim)
    if mask is not None:
        scores = scores + mask.astype(jnp.float32)[None, None]
    probs = jax.nn.softmax(scores, axis=-1).astype(x.dtype)
    out = jnp.einsum("bhsk,bhkd->bhsd", probs, v, precision=HI)
    out = jnp.swapaxes(out, 1, 2).reshape(bsz, seqlen, n_heads * head_dim)
    return (jnp.einsum("bsk,kd->bsd", out, wo, precision=HI),
            cache_k, cache_v)


# ---------------------------------------------------------------------------
# test
# ---------------------------------------------------------------------------

if __name__ == "__main__":
    key = jax.random.PRNGKey(0)
    bsz, seqlen, d_model = 2, 8, 32
    n_heads, n_kv_heads = 4, 2
    head_dim = d_model // n_heads                 # 8
    max_batch, max_seq = 2, 16
    start_pos = 4
    kv_len = start_pos + seqlen                   # 12

    def snap(a):  # snap to bf16 grid so matmul-precision modes agree closely
        return a.astype(jnp.bfloat16).astype(jnp.float32)

    k0, k1, k2, k3, k4 = jax.random.split(key, 5)
    wscale = 1.0 / math.sqrt(d_model)
    x = snap(jax.random.normal(k0, (bsz, seqlen, d_model), jnp.float32))
    wq = snap(jax.random.normal(k1, (d_model, n_heads * head_dim)) * wscale)
    wk = snap(jax.random.normal(k2, (d_model, n_kv_heads * head_dim)) * wscale)
    wv = snap(jax.random.normal(k3, (d_model, n_kv_heads * head_dim)) * wscale)
    wo = snap(jax.random.normal(k4, (n_heads * head_dim, d_model)) * wscale)

    cache_k = jnp.zeros((max_batch, max_seq, n_kv_heads, head_dim), jnp.float32)
    cache_v = jnp.zeros((max_batch, max_seq, n_kv_heads, head_dim), jnp.float32)

    # rotary angles for positions [start_pos, start_pos + seqlen)
    theta = 10000.0
    inv_freq = 1.0 / (theta ** (jnp.arange(0, head_dim, 2, dtype=jnp.float32)
                                / head_dim))
    pos = jnp.arange(start_pos, start_pos + seqlen, dtype=jnp.float32)
    angles = pos[:, None] * inv_freq[None, :]
    freqs_cos, freqs_sin = jnp.cos(angles), jnp.sin(angles)

    out, new_ck, new_cv = gqa_forward(
        x, wq, wk, wv, wo, cache_k, cache_v, start_pos,
        freqs_cos, freqs_sin, n_heads=n_heads, n_kv_heads=n_kv_heads,
        causal=True)
    out = jax.block_until_ready(out)

    # additive causal mask with cache offset (used only by the reference)
    causal_mask = jnp.triu(jnp.full((seqlen, seqlen), -jnp.inf, jnp.float32), k=1)
    mask = jnp.concatenate(
        [jnp.zeros((seqlen, start_pos), jnp.float32), causal_mask], axis=1)

    ref_out, ref_ck, ref_cv = gqa_ref(
        x, wq, wk, wv, wo, cache_k, cache_v, start_pos,
        freqs_cos, freqs_sin, mask, n_heads=n_heads, n_kv_heads=n_kv_heads)

    assert out.shape == (bsz, seqlen, d_model)
    max_err = float(jnp.max(jnp.abs(out - ref_out)))
    assert jnp.allclose(out, ref_out, atol=2e-2, rtol=2e-2), (
        f"output mismatch vs reference: max abs err = {max_err}")
    assert jnp.allclose(new_ck, ref_ck, atol=1e-4, rtol=1e-4), "cache_k mismatch"
    assert jnp.allclose(new_cv, ref_cv, atol=1e-4, rtol=1e-4), "cache_v mismatch"

    print("KERNEL_OK")
</pallas_src>

<mosaic_0001>
module attributes {stable_mosaic.version = 11 : i64} {
  func.func @_matmul_kernel_f32out(%arg0: i32, %arg1: i32, %arg2: i32, %arg3: memref<16x32xf32, #tpu.memory_space<vmem>>, %arg4: memref<32x32xf32, #tpu.memory_space<vmem>>, %arg5: memref<16x32xf32, #tpu.memory_space<vmem>>) attributes {dimension_semantics = [#tpu.dimension_semantics<parallel>, #tpu.dimension_semantics<parallel>, #tpu.dimension_semantics<arbitrary>], iteration_bounds = array<i64: 1, 1, 1>, scalar_prefetch = 0 : i64, scratch_operands = 0 : i64, tpu.core_type = #tpu.core_type<tc>, window_params = [{transform_indices = @transform_0, window_bounds = array<i64: 16, 32>}, {transform_indices = @transform_1, window_bounds = array<i64: 32, 32>}, {transform_indices = @transform_2, window_bounds = array<i64: 16, 32>}]} {
    %c0_i32 = arith.constant 0 : i32
    %0 = arith.cmpi eq, %arg2, %c0_i32 : i32
    %1 = arith.extui %0 : i1 to i32
    %c0_i32_0 = arith.constant 0 : i32
    %2 = arith.cmpi ne, %1, %c0_i32_0 : i32
    scf.if %2 {
      %cst_8 = arith.constant 0.000000e+00 : f32
      %9 = vector.broadcast %cst_8 : f32 to vector<16x32xf32>
      %c0_9 = arith.constant 0 : index
      %c0_10 = arith.constant 0 : index
      %10 = vector.load %arg5[%c0_9, %c0_10] : memref<16x32xf32, #tpu.memory_space<vmem>>, vector<16x32xf32>
      tpu.vector_store %arg5[%c0_9, %c0_10], %9 {strides = array<i32>} : memref<16x32xf32, #tpu.memory_space<vmem>>, vector<16x32xf32>,
    } else {
    }
    %c0 = arith.constant 0 : index
    %c0_1 = arith.constant 0 : index
    %3 = vector.load %arg5[%c0, %c0_1] : memref<16x32xf32, #tpu.memory_space<vmem>>, vector<16x32xf32>
    %c0_2 = arith.constant 0 : index
    %c0_3 = arith.constant 0 : index
    %4 = vector.load %arg3[%c0_2, %c0_3] : memref<16x32xf32, #tpu.memory_space<vmem>>, vector<16x32xf32>
    %c0_4 = arith.constant 0 : index
    %c0_5 = arith.constant 0 : index
    %5 = vector.load %arg4[%c0_4, %c0_5] : memref<32x32xf32, #tpu.memory_space<vmem>>, vector<32x32xf32>
    %cst = arith.constant dense<0.000000e+00> : vector<16x32xf32>
    %6 = tpu.matmul %4, %5, %cst {dimension_numbers = #tpu.dot_dimension_numbers<[1], [0], [0], [1], [0, 0, 1, 1], [], []>} : vector<16x32xf32>, vector<32x32xf32>, vector<16x32xf32> -> vector<16x32xf32>
    %7 = arith.addf %3, %6 : vector<16x32xf32>
    %c0_6 = arith.constant 0 : index
    %c0_7 = arith.constant 0 : index
    %8 = vector.load %arg5[%c0_6, %c0_7] : memref<16x32xf32, #tpu.memory_space<vmem>>, vector<16x32xf32>
    tpu.vector_store %arg5[%c0_6, %c0_7], %7 {strides = array<i32>} : memref<16x32xf32, #tpu.memory_space<vmem>>, vector<16x32xf32>,
    return
  }
  func.func @transform_0(%arg0: i32, %arg1: i32, %arg2: i32) -> (i32, i32) {
    %c0_i32 = arith.constant 0 : i32
    return %arg0, %arg2 : i32, i32
  }
  func.func @transform_1(%arg0: i32, %arg1: i32, %arg2: i32) -> (i32, i32) {
    %c0_i32 = arith.constant 0 : i32
    return %arg2, %arg1 : i32, i32
  }
  func.func @transform_2(%arg0: i32, %arg1: i32, %arg2: i32) -> (i32, i32) {
    %c0_i32 = arith.constant 0 : i32
    return %arg0, %arg1 : i32, i32
  }
}

</mosaic_0001>

<llo_original>
// kernel: tpu_custom_call.1
$region0: #{tpu_custom_call.1}
  #allocation0 [shape = 'u32[]', space=smem, size = 0x4, offset = 0x4, fixed_abs, tag = 'smem constant byte address 0x4 - core index']
  #allocation1 [shape = 'u32[72,128]{1,0:T(1,128)}', space=vmem, size = 0x9000, scoped, tag = 'internal scratch']
  %s0 = inlined_call_operand.hbm [shape: f32[16,32], index: 0, kind: input, shape index: {}]
  %s1 = inlined_call_operand.hbm [shape: f32[32,32], index: 1, kind: input, shape index: {}]
  %s2 = inlined_call_operand.hbm [shape: f32[16,32], index: 2, kind: output, shape index: {}]
  %s3 = sld [smem:[#allocation0]]
  $region30: #{tpu_custom_call.1} parent=0
    _
  %s5 = ssub.s32 1, %s3
  %s6 = scalar_select 0, %s5, %s3
  $region1: #{tpu_custom_call.1} parent=0
    #allocation2 [shape = 'u8[8192]{0}', space=vmem, size = 0x2000, scoped, tag = 'input window, operand 0, single buffered']
    #allocation3 [shape = 's32[1]{0}', space=sflag, size = 0x4, scoped, tag = 'scoped memory for tpu_custom_call.1']
    #allocation4 [shape = 's32[1]{0}', space=sflag, size = 0x4, scoped, tag = 'scoped memory for tpu_custom_call.1']
    #allocation5 [shape = 'u8[16384]{0}', space=vmem, size = 0x4000, scoped, tag = 'input window, operand 1, single buffered']
    #allocation6 [shape = 's32[1]{0}', space=sflag, size = 0x4, scoped, tag = 'scoped memory for tpu_custom_call.1']
    #allocation7 [shape = 'u8[8192]{0}', space=vmem, size = 0x2000, scoped, tag = 'output window, operand 0, single buffered']
    %7 = vsyncpa [#allocation3], 0
    %8 = vsyncpa [#allocation6], 0
    %9 = vsyncpa [#allocation4], 0
    // Predicated region
    $region2: #{tpu_custom_call.1} parent=1 // pred_check
      _
    $region3: #{tpu_custom_call.1} parent=1 // pred_check_branch
      %11 = sbr.rel (0) target = $region5
    $region4: #{tpu_custom_call.1} parent=1 // pred_region
      %13 = vsyncadd [#allocation3], 0
      %s14 = sshll.u32 %s0, 4
      %s15 = int_to_ptr.hbm [resolvable:$true] %s14
      %s16 = sshll.u32 [#allocation2], 4
      %s17 = int_to_ptr.vmem [resolvable:$true] %s16
      %22 = dma.hbm_to_vmem [thread:$0]  %s15, 256, %s17, [#allocation3], 128, 128, 8
    $region5: #{tpu_custom_call.1} parent=1 // pred_fallthru
      _
    // Predicated region
    $region6: #{tpu_custom_call.1} parent=1 // pred_check
      _
    $region7: #{tpu_custom_call.1} parent=1 // pred_check_branch
      %24 = sbr.rel (0) target = $region9
    $region8: #{tpu_custom_call.1} parent=1 // pred_region
      %26 = vsyncadd [#allocation6], 0
      %s27 = sshll.u32 %s1, 4
      %s28 = int_to_ptr.hbm [resolvable:$true] %s27
      %s29 = sshll.u32 [#allocation5], 4
      %s30 = int_to_ptr.vmem [resolvable:$true] %s29
      %35 = dma.hbm_to_vmem [thread:$0]  %s28, 512, %s30, [#allocation6], 128, 128, 8
    $region9: #{tpu_custom_call.1} parent=1 // pred_fallthru
      _
    // Predicated region
    $region10: #{tpu_custom_call.1} parent=1 // pred_check
      _
    $region11: #{tpu_custom_call.1} parent=1 // pred_check_branch
      %37 = sbr.rel (0) target = $region13
    $region12: #{tpu_custom_call.1} parent=1 // pred_region
      %39 = dma.done [#allocation3], 256
    $region13: #{tpu_custom_call.1} parent=1 // pred_fallthru
      _
    // Predicated region
    $region14: #{tpu_custom_call.1} parent=1 // pred_check
      _
    $region15: #{tpu_custom_call.1} parent=1 // pred_check_branch
      %41 = sbr.rel (0) target = $region17
    $region16: #{tpu_custom_call.1} parent=1 // pred_region
      %43 = dma.done [#allocation6], 512
    $region17: #{tpu_custom_call.1} parent=1 // pred_fallthru
      _
    %p44 = scmp.eq.s32.totalorder 0, 0
    // Predicated region
    $region18: #{tpu_custom_call.1} parent=1 // pred_check
      %p45 = pneg %p44
    $region19: #{tpu_custom_call.1} parent=1 // pred_check_branch
      %47 = sbr.rel (%p45) target = $region21
    $region20: #{tpu_custom_call.1} parent=1 // pred_region
      %vm48 = vcmask 261120
      %49 = vst.msk [vmem:[#allocation7] sm:$0xff] %vm48, 0.0
      %50 = vst.msk [vmem:[#allocation7 + $0x8] sm:$0xff] %vm48, 0.0
    $region21: #{tpu_custom_call.1} parent=1 // pred_fallthru
      _
    %v51 = vld [vmem:[#allocation7] sm:$0xff]
    %v52 = vld [vmem:[#allocation7 + $0x8] sm:$0xff]
    %v53 = vld [vmem:[#allocation2] sm:$0xff]
    %v54 = vld [vmem:[#allocation2 + $0x8] sm:$0xff]
    %v55 = vld [vmem:[#allocation5] sm:$0xff]
    %v56 = vld [vmem:[#allocation5 + $0x8] sm:$0xff]
    %v57 = vld [vmem:[#allocation5 + $0x10] sm:$0xff]
    %v58 = vld [vmem:[#allocation5 + $0x18] sm:$0xff]
    %vm59 = vcmask 261120
    %v61 = vsel %vm59, %v53, 0
    %v64 = vsel %vm59, %v54, 0
    %66 = vmatpush.msra.mxu0 0.0
    %67 = vmatpush.msra.mxu0 0.0
    %68 = vmatpush.msra.mxu0 0.0
    %69 = vmatpush.msra.mxu0 0.0
    %70 = vmatpush.msra.mxu0 0.0
    %71 = vmatpush.msra.mxu0 0.0
    %72 = vmatpush.msra.mxu0 0.0
    %73 = vmatpush.msra.mxu0 0.0
    %74 = vmatpush.msra.mxu0 0.0
    %75 = vmatpush.msra.mxu0 0.0
    %76 = vmatpush.msra.mxu0 0.0
    %77 = vmatpush.msra.mxu0 0.0
    %78 = vmatpush.msra.mxu0 %v58
    %79 = vmatpush.msra.mxu0 %v57
    %80 = vmatpush.msra.mxu0 %v56
    %81 = vmatpush.msra.mxu0 %v55
    %82 = vmatmul.f32.gmra.mxu0 %v61
    %v83 = vpop.f32.mrf.mxu0
    %v84 = vadd.f32 0.0, %v83
    %85 = vmatmul.f32.gmra.mxu0 %v64
    %v86 = vpop.f32.mrf.mxu0
    %v87 = vadd.f32 0.0, %v86
    %88 = vdwg.mxu0
    %v89 = vadd.f32 %v51, %v84
    %v90 = vadd.f32 %v52, %v87
    %91 = vst.msk [vmem:[#allocation7] sm:$0xff] %vm59, %v89
    %92 = vst.msk [vmem:[#allocation7 + $0x8] sm:$0xff] %vm59, %v90
    // Predicated region
    $region22: #{tpu_custom_call.1} parent=1 // pred_check
      _
    $region23: #{tpu_custom_call.1} parent=1 // pred_check_branch
      %94 = sbr.rel (0) target = $region25
    $region24: #{tpu_custom_call.1} parent=1 // pred_region
      %96 = vsyncadd [#allocation4], 0
      %s97 = sshll.u32 [#allocation7], 4
      %s98 = int_to_ptr.vmem [resolvable:$true] %s97
      %s99 = sshll.u32 %s2, 4
      %s100 = int_to_ptr.hbm [resolvable:$true] %s99
      %105 = dma.vmem_to_hbm [thread:$0]  %s98, 256, %s100, [#allocation4], 128, 128, 8
    $region25: #{tpu_custom_call.1} parent=1 // pred_fallthru
      _
    // Predicated region
    $region26: #{tpu_custom_call.1} parent=1 // pred_check
      _
    $region27: #{tpu_custom_call.1} parent=1 // pred_check_branch
      %107 = sbr.rel (0) target = $region29
    $region28: #{tpu_custom_call.1} parent=1 // pred_region
      %109 = dma.done [#allocation4], 256
    $region29: #{tpu_custom_call.1} parent=1 // pred_fallthru
      _
    %110 = vsyncpa [#allocation3], 1
    %111 = vsyncpa [#allocation6], 1
    %112 = vsyncpa [#allocation4], 1

</llo_original>
